<compile_context>
chip_gen: v6e
topology: v6e:2x2x1
jax: 0.10.0
libtpu: 0.0.40
codegen_flags: <defaults>
</compile_context>

<pallas_src>
import numpy as np
import jax
import jax.numpy as jnp
from jax.experimental import pallas as pl
from jax.experimental.pallas import tpu as pltpu


# --------------------------- VMEM budgeting helpers ---------------------------
def _round_up(n, m):
    return -(-n // m) * m


def _padded_tile_bytes(sublanes, lanes, bytes_per_elem=4):
    # f32 VMEM tiling pads the last two dims to (8, 128).
    return _round_up(max(sublanes, 1), 8) * _round_up(max(lanes, 1), 128) * bytes_per_elem


def _per_item_vmem_bytes(C, HW, HID):
    # Streamed blocks (double-buffered by the Pallas pipeline).
    streamed = (3 * _padded_tile_bytes(C, HW)       # x0, noise, loss
                + 2 * _padded_tile_bytes(1, 1)      # c1, c2
                + _padded_tile_bytes(HID, 1))       # time embedding
    # Live in-kernel intermediates (x_t, h pre/post-relu, pred, broadcast weights).
    temps = (2 * _padded_tile_bytes(C, HW)
             + 2 * _padded_tile_bytes(HID, HW)
             + _padded_tile_bytes(HID, C) + _padded_tile_bytes(C, HID))
    return 2 * streamed + temps


def _pick_batch_tile(B, C, HW, HID, vmem_budget_bytes=24 << 20):
    """Largest divisor of B that fits the VMEM budget, keeping grid >= 2."""
    per_item = _per_item_vmem_bytes(C, HW, HID)
    cap = max(1, vmem_budget_bytes // per_item)
    cap = min(cap, 256)
    if B >= 2:
        cap = min(cap, B // 2)     # grid >= 2 so v7x can shard batch across its 2 TCs
    bt = 1
    for d in range(1, int(cap) + 1):
        if B % d == 0:
            bt = d
    return bt


# --------------------------------- Pallas kernel -------------------------------
def _diffusion_trainer_kernel(c1_ref,      # VMEM (bt, 1, 1)   sqrt(alphas_bar)[t]
                              c2_ref,      # VMEM (bt, 1, 1)   sqrt(1-alphas_bar)[t]
                              emb_ref,     # VMEM (bt, HID, 1) emb_table[t] + b1
                              x0_ref,      # VMEM (bt, C, HW)
                              noise_ref,   # VMEM (bt, C, HW)
                              w1t_ref,     # VMEM (HID, C)
                              w2t_ref,     # VMEM (C, HID)
                              b2_ref,      # SMEM (C,)
                              loss_ref):   # VMEM (bt, C, HW)  output
    x0 = x0_ref[...]                       # (bt, C, HW)  lane-dense (HW on lanes)
    noise = noise_ref[...]                 # (bt, C, HW)

    # q_sample on the whole block: x_t = sqrt(ab_t)*x0 + sqrt(1-ab_t)*noise
    x_t = c1_ref[...] * x0 + c2_ref[...] * noise

    bt, C, HW = x0.shape
    HID = w1t_ref.shape[0]

    # One batched matmul sequence per grid step (no per-item Python unroll).
    w1b = jnp.broadcast_to(w1t_ref[...][None], (bt, HID, C))
    w2b = jnp.broadcast_to(w2t_ref[...][None], (bt, C, HID))

    # h[b,h,p] = sum_c w1t[h,c] * x_t[b,c,p]
    h = jax.lax.dot_general(w1b, x_t, (((2,), (1,)), ((0,), (0,))),
                            preferred_element_type=jnp.float32)       # (bt, HID, HW)
    h = jnp.maximum(h + emb_ref[...], 0.0)                            # + (bt, HID, 1)

    # pred[b,c,p] = sum_h w2t[c,h] * h[b,h,p]
    pred = jax.lax.dot_general(w2b, h, (((2,), (1,)), ((0,), (0,))),
                               preferred_element_type=jnp.float32)    # (bt, C, HW)

    # b2 bias from SMEM scalars (no padded (C,1) VMEM block), built once per step.
    c_iota = jax.lax.broadcasted_iota(jnp.int32, (1, C, 1), 1)
    bias = jnp.zeros((1, C, 1), jnp.float32)
    for c in range(C):                      # C is tiny and static
        bias = jnp.where(c_iota == c, b2_ref[c], bias)

    # F.mse_loss(pred, noise, reduction='none'), whole-block unmasked store
    d = (pred + bias) - noise
    loss_ref[...] = d * d


# ----------------------------------- wrapper -----------------------------------
def gaussian_diffusion_trainer_loss(x0_nchw, t, noise_nchw,
                                    sab, somab, emb_table, w1, b1, w2, b2,
                                    *, batch_tile=None):
    B, C, H, W = x0_nchw.shape
    HW = H * W
    HID = emb_table.shape[1]

    bt = _pick_batch_tile(B, C, HW, HID) if batch_tile is None else batch_tile
    assert B % bt == 0, "batch_tile must divide batch size"

    # NCHW -> (B, C, HW): pure reshape, no extra HBM passes.
    x0 = x0_nchw.reshape(B, C, HW).astype(jnp.float32)
    noise = noise_nchw.reshape(B, C, HW).astype(jnp.float32)

    # Hoist all t-dependent gathers to the wrapper (trivial XLA gathers).
    t = t.astype(jnp.int32)
    c1 = sab[t].astype(jnp.float32).reshape(B, 1, 1)          # extract(sqrt_alphas_bar, t)
    c2 = somab[t].astype(jnp.float32).reshape(B, 1, 1)        # extract(sqrt_1m_alphas_bar, t)
    emb = (emb_table[t] + b1).astype(jnp.float32)[:, :, None]  # (B, HID, 1), b1 folded in

    # One-time parameter prep for the lane-dense layout.
    w1t = w1.T.astype(jnp.float32)          # (HID, C)
    w2t = w2.T.astype(jnp.float32)          # (C, HID)
    b2_vec = b2.reshape(C).astype(jnp.float32)

    grid = (B // bt,)

    # Explicit VMEM budget (v7x has 64 MiB physical; v5e has a 16 MiB scoped default).
    vmem_bytes = int(min(max(bt * _per_item_vmem_bytes(C, HW, HID) + (4 << 20),
                             16 << 20),
                         48 << 20))

    grid_spec = pltpu.PrefetchScalarGridSpec(
        num_scalar_prefetch=0,
        grid=grid,
        in_specs=[
            pl.BlockSpec((bt, 1, 1), lambda b: (b, 0, 0)),        # c1
            pl.BlockSpec((bt, 1, 1), lambda b: (b, 0, 0)),        # c2
            pl.BlockSpec((bt, HID, 1), lambda b: (b, 0, 0)),      # emb (+ b1)
            # TODO(synk): if profiling shows exposed DMA at large B, add
            # pipeline_mode=pl.Buffered(3) to the x0/noise specs.
            pl.BlockSpec((bt, C, HW), lambda b: (b, 0, 0)),       # x0
            pl.BlockSpec((bt, C, HW), lambda b: (b, 0, 0)),       # noise
            pl.BlockSpec((HID, C), lambda b: (0, 0)),             # w1^T (resident)
            pl.BlockSpec((C, HID), lambda b: (0, 0)),             # w2^T (resident)
            pl.BlockSpec(memory_space=pltpu.MemorySpace.SMEM),    # b2 scalars
        ],
        out_specs=pl.BlockSpec((bt, C, HW), lambda b: (b, 0, 0)),
    )

    loss = pl.pallas_call(
        _diffusion_trainer_kernel,
        out_shape=jax.ShapeDtypeStruct((B, C, HW), jnp.float32),
        grid_spec=grid_spec,
        compiler_params=pltpu.CompilerParams(
            # disjoint output blocks per grid step -> shardable across TensorCores
            dimension_semantics=("parallel",),
            vmem_limit_bytes=vmem_bytes),
    )(c1, c2, emb, x0, noise, w1t, w2t, b2_vec)

    # (B, C, HW) -> NCHW: pure reshape (same shape as x_0, like reduction='none').
    return loss.reshape(B, C, H, W)


# ------------------------------ pure-JAX reference ------------------------------
def _reference_loss(x0_nchw, t, noise_nchw, sab, somab, emb_table, w1, b1, w2, b2):
    B, C, H, W = x0_nchw.shape
    x0 = x0_nchw.reshape(B, C, H * W)
    noise = noise_nchw.reshape(B, C, H * W)
    c1 = sab[t][:, None, None]
    c2 = somab[t][:, None, None]
    x_t = c1 * x0 + c2 * noise
    h = jnp.maximum(jnp.einsum('ch,bcp->bhp', w1, x_t)
                    + b1[0][None, :, None]
                    + emb_table[t][:, :, None], 0.0)
    pred = jnp.einsum('hc,bhp->bcp', w2, h) + b2[0][None, :, None]
    loss = (pred - noise) ** 2
    return loss.reshape(B, C, H, W)


# ------------------------------------- main -------------------------------------
if __name__ == "__main__":
    B, C, H, W = 2, 4, 16, 16
    HID = 32
    T = 100
    beta_1, beta_T = 1e-4, 0.02

    # diffusion schedule (float64 like the PyTorch buffers, then cast to f32)
    betas = np.linspace(beta_1, beta_T, T, dtype=np.float64)
    alphas_bar = np.cumprod(1.0 - betas)
    sab = jnp.asarray(np.sqrt(alphas_bar), dtype=jnp.float32)
    somab = jnp.asarray(np.sqrt(1.0 - alphas_bar), dtype=jnp.float32)

    key = jax.random.PRNGKey(0)
    k_x0, k_t, k_noise, k_emb, k_w1, k_b1, k_w2, k_b2 = jax.random.split(key, 8)

    # The PyTorch forward samples t and noise internally; here they are sampled
    # deterministically in the wrapper and fed to the kernel.
    x0 = jax.random.normal(k_x0, (B, C, H, W), dtype=jnp.float32)
    t = jax.random.randint(k_t, (B,), 0, T, dtype=jnp.int32)
    noise = jax.random.normal(k_noise, (B, C, H, W), dtype=jnp.float32)

    # synthetic model parameters
    emb_table = 0.1 * jax.random.normal(k_emb, (T, HID), dtype=jnp.float32)
    w1 = 0.2 * jax.random.normal(k_w1, (C, HID), dtype=jnp.float32)
    b1 = 0.1 * jax.random.normal(k_b1, (1, HID), dtype=jnp.float32)
    w2 = 0.2 * jax.random.normal(k_w2, (HID, C), dtype=jnp.float32)
    b2 = 0.1 * jax.random.normal(k_b2, (1, C), dtype=jnp.float32)

    # --- toy batch (B=2): auto-chooser keeps bt=1 so the grid still has 2 steps ---
    loss = gaussian_diffusion_trainer_loss(x0, t, noise, sab, somab,
                                           emb_table, w1, b1, w2, b2)
    loss = jax.block_until_ready(loss)
    ref = _reference_loss(x0, t, noise, sab, somab, emb_table, w1, b1, w2, b2)
    assert loss.shape == (B, C, H, W)
    np.testing.assert_allclose(np.asarray(loss), np.asarray(ref),
                               rtol=1e-3, atol=1e-3)

    # --- larger batch to exercise the multi-item-tile path (bt > 1) ---
    B2 = 64
    kx, kt2, kn = jax.random.split(jax.random.PRNGKey(1), 3)
    x0b = jax.random.normal(kx, (B2, C, H, W), dtype=jnp.float32)
    tb = jax.random.randint(kt2, (B2,), 0, T, dtype=jnp.int32)
    noiseb = jax.random.normal(kn, (B2, C, H, W), dtype=jnp.float32)
    lossb = gaussian_diffusion_trainer_loss(x0b, tb, noiseb, sab, somab,
                                            emb_table, w1, b1, w2, b2)
    lossb = jax.block_until_ready(lossb)
    refb = _reference_loss(x0b, tb, noiseb, sab, somab, emb_table, w1, b1, w2, b2)
    np.testing.assert_allclose(np.asarray(lossb), np.asarray(refb),
                               rtol=1e-3, atol=1e-3)

    print("KERNEL_OK")
</pallas_src>

<mosaic_0001>
module attributes {stable_mosaic.version = 11 : i64} {
  func.func @_diffusion_trainer_kernel(%arg0: i32, %arg1: memref<1x1x1xf32, #tpu.memory_space<vmem>>, %arg2: memref<1x1x1xf32, #tpu.memory_space<vmem>>, %arg3: memref<1x32x1xf32, #tpu.memory_space<vmem>>, %arg4: memref<1x4x256xf32, #tpu.memory_space<vmem>>, %arg5: memref<1x4x256xf32, #tpu.memory_space<vmem>>, %arg6: memref<32x4xf32, #tpu.memory_space<vmem>>, %arg7: memref<4x32xf32, #tpu.memory_space<vmem>>, %arg8: memref<4xf32, #tpu.memory_space<smem>>, %arg9: memref<1x4x256xf32, #tpu.memory_space<vmem>>) attributes {dimension_semantics = [#tpu.dimension_semantics<parallel>], iteration_bounds = array<i64: 2>, scalar_prefetch = 0 : i64, scratch_operands = 0 : i64, tpu.core_type = #tpu.core_type<tc>, window_params = [{transform_indices = @transform_0, window_bounds = array<i64: 1, 1, 1>}, {transform_indices = @transform_1, window_bounds = array<i64: 1, 1, 1>}, {transform_indices = @transform_2, window_bounds = array<i64: 1, 32, 1>}, {transform_indices = @transform_3, window_bounds = array<i64: 1, 4, 256>}, {transform_indices = @transform_4, window_bounds = array<i64: 1, 4, 256>}, {pipeline_mode = #tpu.pipeline_mode<synchronous>, transform_indices = @transform_5, window_bounds = array<i64: 32, 4>}, {pipeline_mode = #tpu.pipeline_mode<synchronous>, transform_indices = @transform_6, window_bounds = array<i64: 4, 32>}, {transform_indices = @transform_7, window_bounds = array<i64: 4>}, {transform_indices = @transform_8, window_bounds = array<i64: 1, 4, 256>}]} {
    %c0 = arith.constant 0 : index
    %c0_0 = arith.constant 0 : index
    %c0_1 = arith.constant 0 : index
    %0 = vector.load %arg4[%c0, %c0_0, %c0_1] : memref<1x4x256xf32, #tpu.memory_space<vmem>>, vector<1x4x256xf32>
    %c0_2 = arith.constant 0 : index
    %c0_3 = arith.constant 0 : index
    %c0_4 = arith.constant 0 : index
    %1 = vector.load %arg5[%c0_2, %c0_3, %c0_4] : memref<1x4x256xf32, #tpu.memory_space<vmem>>, vector<1x4x256xf32>
    %c0_5 = arith.constant 0 : index
    %c0_6 = arith.constant 0 : index
    %c0_7 = arith.constant 0 : index
    %2 = vector.load %arg1[%c0_5, %c0_6, %c0_7] : memref<1x1x1xf32, #tpu.memory_space<vmem>>, vector<1x1x1xf32>
    %3 = vector.broadcast %2 : vector<1x1x1xf32> to vector<1x4x256xf32>
    %4 = arith.mulf %3, %0 : vector<1x4x256xf32>
    %c0_8 = arith.constant 0 : index
    %c0_9 = arith.constant 0 : index
    %c0_10 = arith.constant 0 : index
    %5 = vector.load %arg2[%c0_8, %c0_9, %c0_10] : memref<1x1x1xf32, #tpu.memory_space<vmem>>, vector<1x1x1xf32>
    %6 = vector.broadcast %5 : vector<1x1x1xf32> to vector<1x4x256xf32>
    %7 = arith.mulf %6, %1 : vector<1x4x256xf32>
    %8 = arith.addf %4, %7 : vector<1x4x256xf32>
    %c0_11 = arith.constant 0 : index
    %c0_12 = arith.constant 0 : index
    %9 = vector.load %arg6[%c0_11, %c0_12] : memref<32x4xf32, #tpu.memory_space<vmem>>, vector<32x4xf32>
    %10 = vector.shape_cast %9 : vector<32x4xf32> to vector<1x32x4xf32>
    %c0_13 = arith.constant 0 : index
    %c0_14 = arith.constant 0 : index
    %11 = vector.load %arg7[%c0_13, %c0_14] : memref<4x32xf32, #tpu.memory_space<vmem>>, vector<4x32xf32>
    %12 = vector.shape_cast %11 : vector<4x32xf32> to vector<1x4x32xf32>
    %cst = arith.constant dense<0.000000e+00> : vector<1x32x256xf32>
    %13 = tpu.matmul %10, %8, %cst {dimension_numbers = #tpu.dot_dimension_numbers<[2], [1], [1], [2], [0, 0, 0, 1, 1, 2], [0], [0]>} : vector<1x32x4xf32>, vector<1x4x256xf32>, vector<1x32x256xf32> -> vector<1x32x256xf32>
    %c0_15 = arith.constant 0 : index
    %c0_16 = arith.constant 0 : index
    %c0_17 = arith.constant 0 : index
    %14 = vector.load %arg3[%c0_15, %c0_16, %c0_17] : memref<1x32x1xf32, #tpu.memory_space<vmem>>, vector<1x32x1xf32>
    %15 = vector.broadcast %14 : vector<1x32x1xf32> to vector<1x32x256xf32>
    %16 = arith.addf %13, %15 : vector<1x32x256xf32>
    %cst_18 = arith.constant 0.000000e+00 : f32
    %17 = vector.broadcast %cst_18 : f32 to vector<1x32x256xf32>
    %18 = arith.maximumf %16, %17 : vector<1x32x256xf32>
    %cst_19 = arith.constant dense<0.000000e+00> : vector<1x4x256xf32>
    %19 = tpu.matmul %12, %18, %cst_19 {dimension_numbers = #tpu.dot_dimension_numbers<[2], [1], [1], [2], [0, 0, 0, 1, 1, 2], [0], [0]>} : vector<1x4x32xf32>, vector<1x32x256xf32>, vector<1x4x256xf32> -> vector<1x4x256xf32>
    %20 = tpu.iota {dimensions = array<i32: 1>} : vector<1x4x1xi32>
    %cst_20 = arith.constant 0.000000e+00 : f32
    %21 = vector.broadcast %cst_20 : f32 to vector<1x4x1xf32>
    %c0_i32 = arith.constant 0 : i32
    %22 = vector.broadcast %c0_i32 : i32 to vector<1x4x1xi32>
    %23 = arith.cmpi eq, %20, %22 : vector<1x4x1xi32>
    %c0_21 = arith.constant 0 : index
    %24 = memref.load %arg8[%c0_21] : memref<4xf32, #tpu.memory_space<smem>>
    %25 = vector.broadcast %24 : f32 to vector<1x4x1xf32>
    %26 = arith.select %23, %25, %21 : vector<1x4x1xi1>, vector<1x4x1xf32>
    %c1_i32 = arith.constant 1 : i32
    %27 = vector.broadcast %c1_i32 : i32 to vector<1x4x1xi32>
    %28 = arith.cmpi eq, %20, %27 : vector<1x4x1xi32>
    %c1 = arith.constant 1 : index
    %29 = memref.load %arg8[%c1] : memref<4xf32, #tpu.memory_space<smem>>
    %30 = vector.broadcast %29 : f32 to vector<1x4x1xf32>
    %31 = arith.select %28, %30, %26 : vector<1x4x1xi1>, vector<1x4x1xf32>
    %c2_i32 = arith.constant 2 : i32
    %32 = vector.broadcast %c2_i32 : i32 to vector<1x4x1xi32>
    %33 = arith.cmpi eq, %20, %32 : vector<1x4x1xi32>
    %c2 = arith.constant 2 : index
    %34 = memref.load %arg8[%c2] : memref<4xf32, #tpu.memory_space<smem>>
    %35 = vector.broadcast %34 : f32 to vector<1x4x1xf32>
    %36 = arith.select %33, %35, %31 : vector<1x4x1xi1>, vector<1x4x1xf32>
    %c3_i32 = arith.constant 3 : i32
    %37 = vector.broadcast %c3_i32 : i32 to vector<1x4x1xi32>
    %38 = arith.cmpi eq, %20, %37 : vector<1x4x1xi32>
    %c3 = arith.constant 3 : index
    %39 = memref.load %arg8[%c3] : memref<4xf32, #tpu.memory_space<smem>>
    %40 = vector.broadcast %39 : f32 to vector<1x4x1xf32>
    %41 = arith.select %38, %40, %36 : vector<1x4x1xi1>, vector<1x4x1xf32>
    %42 = vector.broadcast %41 : vector<1x4x1xf32> to vector<1x4x256xf32>
    %43 = arith.addf %19, %42 : vector<1x4x256xf32>
    %44 = arith.subf %43, %1 : vector<1x4x256xf32>
    %45 = arith.mulf %44, %44 : vector<1x4x256xf32>
    %c0_22 = arith.constant 0 : index
    %c0_23 = arith.constant 0 : index
    %c0_24 = arith.constant 0 : index
    %46 = vector.load %arg9[%c0_22, %c0_23, %c0_24] : memref<1x4x256xf32, #tpu.memory_space<vmem>>, vector<1x4x256xf32>
    tpu.vector_store %arg9[%c0_22, %c0_23, %c0_24], %45 {strides = array<i32>} : memref<1x4x256xf32, #tpu.memory_space<vmem>>, vector<1x4x256xf32>,
    return
  }
  func.func @transform_0(%arg0: i32) -> (i32, i32, i32) {
    %c0_i32 = arith.constant 0 : i32
    %c0_i32_0 = arith.constant 0 : i32
    %c0_i32_1 = arith.constant 0 : i32
    return %arg0, %c0_i32, %c0_i32_0 : i32, i32, i32
  }
  func.func @transform_1(%arg0: i32) -> (i32, i32, i32) {
    %c0_i32 = arith.constant 0 : i32
    %c0_i32_0 = arith.constant 0 : i32
    %c0_i32_1 = arith.constant 0 : i32
    return %arg0, %c0_i32, %c0_i32_0 : i32, i32, i32
  }
  func.func @transform_2(%arg0: i32) -> (i32, i32, i32) {
    %c0_i32 = arith.constant 0 : i32
    %c0_i32_0 = arith.constant 0 : i32
    %c0_i32_1 = arith.constant 0 : i32
    return %arg0, %c0_i32, %c0_i32_0 : i32, i32, i32
  }
  func.func @transform_3(%arg0: i32) -> (i32, i32, i32) {
    %c0_i32 = arith.constant 0 : i32
    %c0_i32_0 = arith.constant 0 : i32
    %c0_i32_1 = arith.constant 0 : i32
    return %arg0, %c0_i32, %c0_i32_0 : i32, i32, i32
  }
  func.func @transform_4(%arg0: i32) -> (i32, i32, i32) {
    %c0_i32 = arith.constant 0 : i32
    %c0_i32_0 = arith.constant 0 : i32
    %c0_i32_1 = arith.constant 0 : i32
    return %arg0, %c0_i32, %c0_i32_0 : i32, i32, i32
  }
  func.func @transform_5(%arg0: i32) -> (i32, i32) {
    %c0_i32 = arith.constant 0 : i32
    %c0_i32_0 = arith.constant 0 : i32
    %c0_i32_1 = arith.constant 0 : i32
    return %c0_i32, %c0_i32_0 : i32, i32
  }
  func.func @transform_6(%arg0: i32) -> (i32, i32) {
    %c0_i32 = arith.constant 0 : i32
    %c0_i32_0 = arith.constant 0 : i32
    %c0_i32_1 = arith.constant 0 : i32
    return %c0_i32, %c0_i32_0 : i32, i32
  }
  func.func @transform_7(%arg0: i32) -> i32 {
    %c0_i32 = arith.constant 0 : i32
    %c0_i32_0 = arith.constant 0 : i32
    return %c0_i32 : i32
  }
  func.func @transform_8(%arg0: i32) -> (i32, i32, i32) {
    %c0_i32 = arith.constant 0 : i32
    %c0_i32_0 = arith.constant 0 : i32
    %c0_i32_1 = arith.constant 0 : i32
    return %arg0, %c0_i32, %c0_i32_0 : i32, i32, i32
  }
}

</mosaic_0001>

<llo_original>
// kernel: tpu_custom_call.1
$region0: #{tpu_custom_call.1}
  #allocation0 [shape = 'u32[]', space=smem, size = 0x4, offset = 0x4, fixed_abs, tag = 'smem constant byte address 0x4 - core index']
  #allocation1 [shape = 'u32[144,128]{1,0:T(1,128)}', space=vmem, size = 0x12000, scoped, tag = 'internal scratch']
  %s0 = inlined_call_operand.vmem [shape: f32[2,1,1], index: 0, kind: input, shape index: {}]
  %s1 = inlined_call_operand.vmem [shape: f32[2,1,1], index: 1, kind: input, shape index: {}]
  %s2 = inlined_call_operand.vmem [shape: f32[2,32,1], index: 2, kind: input, shape index: {}]
  %s3 = inlined_call_operand.vmem [shape: f32[2,4,256], index: 3, kind: input, shape index: {}]
  %s4 = inlined_call_operand.vmem [shape: f32[2,4,256], index: 4, kind: input, shape index: {}]
  %s5 = inlined_call_operand.vmem [shape: f32[32,4], index: 5, kind: input, shape index: {}]
  %s6 = inlined_call_operand.vmem [shape: f32[4,32], index: 6, kind: input, shape index: {}]
  %s7 = inlined_call_operand.vmem [shape: f32[4], index: 7, kind: input, shape index: {}]
  %s8 = inlined_call_operand.hbm [shape: f32[2,4,256], index: 8, kind: output, shape index: {}]
  %s9 = sld [smem:[#allocation0]]
  $region69: #{tpu_custom_call.1} parent=0
    _
  %s11 = ssub.s32 1, %s9
  %s12 = scalar_select 0, %s11, %s9
  $region1: #{tpu_custom_call.1} parent=0
    #allocation2 [shape = 'u8[512]{0}', space=smem, size = 0x200, scoped, tag = 'input window, operand 7, single buffered']
    #allocation3 [shape = 's32[2]{0}', space=sflag, size = 0x8, scoped, tag = 'scoped memory for tpu_custom_call.1']
    #allocation4 [shape = 's32[2]{0}', space=sflag, size = 0x8, scoped, tag = 'scoped memory for tpu_custom_call.1']
    #allocation5 [shape = 'u8[8192]{0}', space=vmem, size = 0x2000, scoped, tag = 'output window, operand 0']
    %13 = vsyncpa [#allocation4], 0
    %14 = vsyncpa [#allocation3], 0
    %s15 = scalar_lea.sflag [#allocation3], 1
    %16 = vsyncpa %s15, 0
    loop: start=0, step=1, limit=4
    $region2: #{tpu_custom_call.1} parent=1 // loop_pre_header
      _
    $region3: #{tpu_custom_call.1} parent=1 // loop_header
      %s18 = sphi 0, %s22
      %p19 = scmp.ge.s32.totalorder %s18, 4
      %s28 = sphi 0, %s30
      %s31 = sphi 0, %s28
      %s32 = sphi 0, %s31
      %s48 = sphi 0, %s32
      %s54 = sphi 0, %s56
      %s57 = sphi 0, %s54
      %s58 = sphi 0, %s57
      %s74 = sphi 0, %s58
      %s80 = sphi 0, %s82
      %s83 = sphi 0, %s80
      %s84 = sphi 0, %s83
      %s100 = sphi 0, %s84
      %s106 = sphi 0, %s108
      %s109 = sphi 0, %s106
      %s110 = sphi 0, %s109
      %s126 = sphi 0, %s110
      %s132 = sphi 0, %s134
      %s135 = sphi 0, %s132
      %s136 = sphi 0, %s135
      %s152 = sphi 0, %s136
      %s156 = sphi 0, %s156
      %s158 = sphi 0, %s156
      %s159 = sphi 0, %s158
      %s173 = sphi 0, %s159
      %s177 = sphi 0, %s177
      %s179 = sphi 0, %s177
      %s180 = sphi 0, %s179
      %s194 = sphi 0, %s180
      %s198 = sphi 0, %s198
      %s200 = sphi 0, %s198
      %s201 = sphi 0, %s200
      %s215 = sphi 0, %s201
      %s221 = sphi 0, %s223
      %s224 = sphi 0, %s221
      %s225 = sphi 0, %s224
      %s241 = sphi 0, %s225
    $region4: #{tpu_custom_call.1} parent=1 // loop_header_branch
      %21 = sbr.rel (%p19) target = $region8
    $region5: #{tpu_custom_call.1} parent=1 // loop_body
      %s23 = ssub.s32 %s18, 1
      %s24 = ssub.s32 %s18, 2
      %s25 = sadd.s32 %s18, 1
      %s26 = ssub.s32 %s18, %s25
      %p27 = scmp.eq.s32.totalorder %s26, 0
      %s29 = sadd.s32 %s28, 1
      %s30 = scalar_select %p27, %s28, %s29
      %p33 = pneg %p27
      %p34 = scmp.eq.s32.totalorder %s18, 1
      %p35 = por %p33, %p34
      %p36 = scmp.ne.s32.totalorder %s28, %s31
      %p37 = scmp.eq.s32.totalorder %s18, 0
      %p38 = por %p36, %p37
      %p39 = scmp.ne.s32.totalorder %s28, %s31
      %p40 = scmp.eq.s32.totalorder %s23, 1
      %p41 = por %p39, %p40
      %p42 = scmp.ne.s32.totalorder %s31, %s32
      %p43 = scmp.eq.s32.totalorder %s23, 0
      %p44 = por %p42, %p43
      %p45 = scmp.ne.s32.totalorder %s31, %s32
      %p46 = scmp.eq.s32.totalorder %s24, 1
      %p47 = por %p45, %p46
      %p49 = scmp.ne.s32.totalorder %s32, %s48
      %p50 = scmp.eq.s32.totalorder %s24, 0
      %p51 = por %p49, %p50
      %s52 = ssub.s32 %s18, %s25
      %p53 = scmp.eq.s32.totalorder %s52, 0
      %s55 = sadd.s32 %s54, 1
      %s56 = scalar_select %p53, %s54, %s55
      %p59 = pneg %p53
      %p60 = scmp.eq.s32.totalorder %s18, 1
      %p61 = por %p59, %p60
      %p62 = scmp.ne.s32.totalorder %s54, %s57
      %p63 = scmp.eq.s32.totalorder %s18, 0
      %p64 = por %p62, %p63
      %p65 = scmp.ne.s32.totalorder %s54, %s57
      %p66 = scmp.eq.s32.totalorder %s23, 1
      %p67 = por %p65, %p66
      %p68 = scmp.ne.s32.totalorder %s57, %s58
      %p69 = scmp.eq.s32.totalorder %s23, 0
      %p70 = por %p68, %p69
      %p71 = scmp.ne.s32.totalorder %s57, %s58
      %p72 = scmp.eq.s32.totalorder %s24, 1
      %p73 = por %p71, %p72
      %p75 = scmp.ne.s32.totalorder %s58, %s74
      %p76 = scmp.eq.s32.totalorder %s24, 0
      %p77 = por %p75, %p76
      %s78 = ssub.s32 %s18, %s25
      %p79 = scmp.eq.s32.totalorder %s78, 0
      %s81 = sadd.s32 %s80, 1
      %s82 = scalar_select %p79, %s80, %s81
      %p85 = pneg %p79
      %p86 = scmp.eq.s32.totalorder %s18, 1
      %p87 = por %p85, %p86
      %p88 = scmp.ne.s32.totalorder %s80, %s83
      %p89 = scmp.eq.s32.totalorder %s18, 0
      %p90 = por %p88, %p89
      %p91 = scmp.ne.s32.totalorder %s80, %s83
      %p92 = scmp.eq.s32.totalorder %s23, 1
      %p93 = por %p91, %p92
      %p94 = scmp.ne.s32.totalorder %s83, %s84
      %p95 = scmp.eq.s32.totalorder %s23, 0
      %p96 = por %p94, %p95
      %p97 = scmp.ne.s32.totalorder %s83, %s84
      %p98 = scmp.eq.s32.totalorder %s24, 1
      %p99 = por %p97, %p98
      %p101 = scmp.ne.s32.totalorder %s84, %s100
      %p102 = scmp.eq.s32.totalorder %s24, 0
      %p103 = por %p101, %p102
      %s104 = ssub.s32 %s18, %s25
      %p105 = scmp.eq.s32.totalorder %s104, 0
      %s107 = sadd.s32 %s106, 1
      %s108 = scalar_select %p105, %s106, %s107
      %p111 = pneg %p105
      %p112 = scmp.eq.s32.totalorder %s18, 1
      %p113 = por %p111, %p112
      %p114 = scmp.ne.s32.totalorder %s106, %s109
      %p115 = scmp.eq.s32.totalorder %s18, 0
      %p116 = por %p114, %p115
      %p117 = scmp.ne.s32.totalorder %s106, %s109
      %p118 = scmp.eq.s32.totalorder %s23, 1
      %p119 = por %p117, %p118
      %p120 = scmp.ne.s32.totalorder %s109, %s110
      %p121 = scmp.eq.s32.totalorder %s23, 0
      %p122 = por %p120, %p121
      %p123 = scmp.ne.s32.totalorder %s109, %s110
      %p124 = scmp.eq.s32.totalorder %s24, 1
      %p125 = por %p123, %p124
      %p127 = scmp.ne.s32.totalorder %s110, %s126
      %p128 = scmp.eq.s32.totalorder %s24, 0
      %p129 = por %p127, %p128
      %s130 = ssub.s32 %s18, %s25
      %p131 = scmp.eq.s32.totalorder %s130, 0
      %s133 = sadd.s32 %s132, 1
      %s134 = scalar_select %p131, %s132, %s133
      %p137 = pneg %p131
      %p138 = scmp.eq.s32.totalorder %s18, 1
      %p139 = por %p137, %p138
      %p140 = scmp.ne.s32.totalorder %s132, %s135
      %p141 = scmp.eq.s32.totalorder %s18, 0
      %p142 = por %p140, %p141
      %p143 = scmp.ne.s32.totalorder %s132, %s135
      %p144 = scmp.eq.s32.totalorder %s23, 1
      %p145 = por %p143, %p144
      %p146 = scmp.ne.s32.totalorder %s135, %s136
      %p147 = scmp.eq.s32.totalorder %s23, 0
      %p148 = por %p146, %p147
      %p149 = scmp.ne.s32.totalorder %s135, %s136
      %p150 = scmp.eq.s32.totalorder %s24, 1
      %p151 = por %p149, %p150
      %p153 = scmp.ne.s32.totalorder %s136, %s152
      %p154 = scmp.eq.s32.totalorder %s24, 0
      %p155 = por %p153, %p154
      %s157 = sadd.s32 %s156, 1
      %p160 = scmp.eq.s32.totalorder %s18, 1
      %p161 = scmp.ne.s32.totalorder %s156, %s158
      %p162 = scmp.eq.s32.totalorder %s18, 0
      %p163 = por %p161, %p162
      %p164 = scmp.ne.s32.totalorder %s156, %s158
      %p165 = scmp.eq.s32.totalorder %s23, 1
      %p166 = por %p164, %p165
      %p167 = scmp.ne.s32.totalorder %s158, %s159
      %p168 = scmp.eq.s32.totalorder %s23, 0
      %p169 = por %p167, %p168
      %p170 = scmp.ne.s32.totalorder %s158, %s159
      %p171 = scmp.eq.s32.totalorder %s24, 1
      %p172 = por %p170, %p171
      %p174 = scmp.ne.s32.totalorder %s159, %s173
      %p175 = scmp.eq.s32.totalorder %s24, 0
      %p176 = por %p174, %p175
      %s178 = sadd.s32 %s177, 1
      %p181 = scmp.eq.s32.totalorder %s18, 1
      %p182 = scmp.ne.s32.totalorder %s177, %s179
      %p183 = scmp.eq.s32.totalorder %s18, 0
      %p184 = por %p182, %p183
      %p185 = scmp.ne.s32.totalorder %s177, %s179
      %p186 = scmp.eq.s32.totalorder %s23, 1
      %p187 = por %p185, %p186
      %p188 = scmp.ne.s32.totalorder %s179, %s180
      %p189 = scmp.eq.s32.totalorder %s23, 0
      %p190 = por %p188, %p189
      %p191 = scmp.ne.s32.totalorder %s179, %s180
      %p192 = scmp.eq.s32.totalorder %s24, 1
      %p193 = por %p191, %p192
      %p195 = scmp.ne.s32.totalorder %s180, %s194
      %p196 = scmp.eq.s32.totalorder %s24, 0
      %p197 = por %p195, %p196
      %s199 = sadd.s32 %s198, 1
      %p202 = scmp.eq.s32.totalorder %s18, 1
      %p203 = scmp.ne.s32.totalorder %s198, %s200
      %p204 = scmp.eq.s32.totalorder %s18, 0
      %p205 = por %p203, %p204
      %p206 = scmp.ne.s32.totalorder %s198, %s200
      %p207 = scmp.eq.s32.totalorder %s23, 1
      %p208 = por %p206, %p207
      %p209 = scmp.ne.s32.totalorder %s200, %s201
      %p210 = scmp.eq.s32.totalorder %s23, 0
      %p211 = por %p209, %p210
      %p212 = scmp.ne.s32.totalorder %s200, %s201
      %p213 = scmp.eq.s32.totalorder %s24, 1
      %p214 = por %p212, %p213
      %p216 = scmp.ne.s32.totalorder %s201, %s215
      %p217 = scmp.eq.s32.totalorder %s24, 0
      %p218 = por %p216, %p217
      %s219 = ssub.s32 %s18, %s25
      %p220 = scmp.eq.s32.totalorder %s219, 0
      %s222 = sadd.s32 %s221, 1
      %s223 = scalar_select %p220, %s221, %s222
      %p226 = pneg %p220
      %p227 = scmp.eq.s32.totalorder %s18, 1
      %p228 = por %p226, %p227
      %p229 = scmp.ne.s32.totalorder %s221, %s224
      %p230 = scmp.eq.s32.totalorder %s18, 0
      %p231 = por %p229, %p230
      %p232 = scmp.ne.s32.totalorder %s221, %s224
      %p233 = scmp.eq.s32.totalorder %s23, 1
      %p234 = por %p232, %p233
      %p235 = scmp.ne.s32.totalorder %s224, %s225
      %p236 = scmp.eq.s32.totalorder %s23, 0
      %p237 = por %p235, %p236
      %p238 = scmp.ne.s32.totalorder %s224, %s225
      %p239 = scmp.eq.s32.totalorder %s24, 1
      %p240 = por %p238, %p239
      %p242 = scmp.ne.s32.totalorder %s225, %s241
      %p243 = scmp.eq.s32.totalorder %s24, 0
      %p244 = por %p242, %p243
      %p245 = scmp.le.s32.totalorder 1, %s18
      %p246 = scmp.lt.s32.totalorder %s18, 3
      %p247 = pnand %p245, %p246
      %p248 = pneg %p247
      // Predicated region
      $region9: #{tpu_custom_call.1} parent=5 // pred_check
        _
      $region10: #{tpu_custom_call.1} parent=5 // pred_check_branch
        %250 = sbr.rel (%p247) target = $region12
      $region11: #{tpu_custom_call.1} parent=5 // pred_region
        %s251 = ssub.s32 %s18, 1
        // Predicated region
        $region13: #{tpu_custom_call.1} parent=11 // pred_check
          %p252 = pneg %p169
        $region14: #{tpu_custom_call.1} parent=11 // pred_check_branch
          %254 = sbr.rel (%p252) target = $region16
        $region15: #{tpu_custom_call.1} parent=11 // pred_region
          _
        $region16: #{tpu_custom_call.1} parent=11 // pred_fallthru
          _
        // Predicated region
        $region17: #{tpu_custom_call.1} parent=11 // pred_check
          %p255 = pneg %p190
        $region18: #{tpu_custom_call.1} parent=11 // pred_check_branch
          %257 = sbr.rel (%p255) target = $region20
        $region19: #{tpu_custom_call.1} parent=11 // pred_region
          _
        $region20: #{tpu_custom_call.1} parent=11 // pred_fallthru
          _
        // Predicated region
        $region21: #{tpu_custom_call.1} parent=11 // pred_check
          %p258 = pneg %p211
        $region22: #{tpu_custom_call.1} parent=11 // pred_check_branch
          %260 = sbr.rel (%p258) target = $region24
        $region23: #{tpu_custom_call.1} parent=11 // pred_region
          %s262 = ssub.s32 16, 16
          %263 = vsyncadd [#allocation4], %s262
          %s265 = sshll.u32 %s7, 4
          %s266 = int_to_ptr.vmem [resolvable:$true] %s265
          %268 = dma.vmem_to_smem %s266, 16, [#allocation2], [#allocation4]
        $region24: #{tpu_custom_call.1} parent=11 // pred_fallthru
          _
      $region12: #{tpu_custom_call.1} parent=5 // pred_fallthru
        _
      %p269 = scmp.lt.s32.totalorder %s18, 2
      // Predicated region
      $region25: #{tpu_custom_call.1} parent=5 // pred_check
        %p270 = pneg %p269
      $region26: #{tpu_custom_call.1} parent=5 // pred_check_branch
        %272 = sbr.rel (%p270) target = $region28
      $region27: #{tpu_custom_call.1} parent=5 // pred_region
        // Predicated region
        $region29: #{tpu_custom_call.1} parent=27 // pred_check
          %p273 = pneg %p38
        $region30: #{tpu_custom_call.1} parent=27 // pred_check_branch
          %275 = sbr.rel (%p273) target = $region32
        $region31: #{tpu_custom_call.1} parent=27 // pred_region
          %p276 = scmp.lt.s32.totalorder %s18, 1
          %s277 = scalar_select %p276, %s18, 1
          %s278 = scalar_lea.vmem %s0, %s277
        $region32: #{tpu_custom_call.1} parent=27 // pred_fallthru
          _
        // Predicated region
        $region33: #{tpu_custom_call.1} parent=27 // pred_check
          %p279 = pneg %p64
        $region34: #{tpu_custom_call.1} parent=27 // pred_check_branch
          %281 = sbr.rel (%p279) target = $region36
        $region35: #{tpu_custom_call.1} parent=27 // pred_region
          %p282 = scmp.lt.s32.totalorder %s18, 1
          %s283 = scalar_select %p282, %s18, 1
          %s284 = scalar_lea.vmem %s1, %s283
        $region36: #{tpu_custom_call.1} parent=27 // pred_fallthru
          _
        // Predicated region
        $region37: #{tpu_custom_call.1} parent=27 // pred_check
          %p285 = pneg %p90
        $region38: #{tpu_custom_call.1} parent=27 // pred_check_branch
          %287 = sbr.rel (%p285) target = $region40
        $region39: #{tpu_custom_call.1} parent=27 // pred_region
          %p288 = scmp.lt.s32.totalorder %s18, 1
          %s289 = scalar_select %p288, %s18, 1
          %s290 = smul.addr %s289, 4
          %s291 = smul.addr %s290, 8
          %s292 = scalar_lea.vmem %s2, %s291
        $region40: #{tpu_custom_call.1} parent=27 // pred_fallthru
          _
        // Predicated region
        $region41: #{tpu_custom_call.1} parent=27 // pred_check
          %p293 = pneg %p116
        $region42: #{tpu_custom_call.1} parent=27 // pred_check_branch
          %295 = sbr.rel (%p293) target = $region44
        $region43: #{tpu_custom_call.1} parent=27 // pred_region
          %p296 = scmp.lt.s32.totalorder %s18, 1
          %s297 = scalar_select %p296, %s18, 1
          %s298 = smul.addr %s297, 2
          %s299 = smul.addr %s298, 4
          %s300 = scalar_lea.vmem %s3, %s299
        $region44: #{tpu_custom_call.1} parent=27 // pred_fallthru
          _
        // Predicated region
        $region45: #{tpu_custom_call.1} parent=27 // pred_check
          %p301 = pneg %p142
        $region46: #{tpu_custom_call.1} parent=27 // pred_check_branch
          %303 = sbr.rel (%p301) target = $region48
        $region47: #{tpu_custom_call.1} parent=27 // pred_region
          %p304 = scmp.lt.s32.totalorder %s18, 1
          %s305 = scalar_select %p304, %s18, 1
          %s306 = smul.addr %s305, 2
          %s307 = smul.addr %s306, 4
          %s308 = scalar_lea.vmem %s4, %s307
        $region48: #{tpu_custom_call.1} parent=27 // pred_fallthru
          _
      $region28: #{tpu_custom_call.1} parent=5 // pred_fallthru
        _
      %p309 = scmp.le.s32.totalorder 1, %s18
      %p310 = scmp.lt.s32.totalorder %s18, 3
      %p311 = pnand %p309, %p310
      %p312 = pneg %p311
      // Predicated region
      $region49: #{tpu_custom_call.1} parent=5 // pred_check
        _
      $region50: #{tpu_custom_call.1} parent=5 // pred_check_branch
        %314 = sbr.rel (%p311) target = $region52
      $region51: #{tpu_custom_call.1} parent=5 // pred_region
        %s315 = ssub.s32 %s18, 1
        // Predicated region
        $region53: #{tpu_custom_call.1} parent=51 // pred_check
          %p316 = pneg %p211
        $region54: #{tpu_custom_call.1} parent=51 // pred_check_branch
          %318 = sbr.rel (%p316) target = $region56
        $region55: #{tpu_custom_call.1} parent=51 // pred_region
          %319 = dma.done [#allocation4], 16
        $region56: #{tpu_custom_call.1} parent=51 // pred_fallthru
          _
        %320 = sfence
        %p321 = scmp.lt.s32.totalorder %s23, 1
        %s322 = scalar_select %p321, %s23, 1
        %s323 = scalar_lea.vmem %s0, %s322
        %p324 = pneg %p44
        %p325 = pneg %p41
        %p326 = scmp.lt.s32.totalorder %s23, 1
        %s327 = scalar_select %p326, %s23, 1
        %s328 = scalar_lea.vmem %s1, %s327
        %p329 = pneg %p70
        %p330 = pneg %p67
        %p331 = scmp.lt.s32.totalorder %s23, 1
        %s332 = scalar_select %p331, %s23, 1
        %s333 = smul.addr %s332, 4
        %s334 = smul.addr %s333, 8
        %s335 = scalar_lea.vmem %s2, %s334
        %p336 = pneg %p96
        %p337 = pneg %p93
        %p338 = scmp.lt.s32.totalorder %s23, 1
        %s339 = scalar_select %p338, %s23, 1
        %s340 = smul.addr %s339, 2
        %s341 = smul.addr %s340, 4
        %s342 = scalar_lea.vmem %s3, %s341
        %p343 = pneg %p122
        %p344 = pneg %p119
        %p345 = scmp.lt.s32.totalorder %s23, 1
        %s346 = scalar_select %p345, %s23, 1
        %s347 = smul.addr %s346, 2
        %s348 = smul.addr %s347, 4
        %s349 = scalar_lea.vmem %s4, %s348
        %p350 = pneg %p148
        %p351 = pneg %p145
        %p352 = pneg %p169
        %p353 = pneg %p166
        %p354 = pneg %p190
        %p355 = pneg %p187
        %p356 = pneg %p211
        %p357 = pneg %p208
        %p358 = pneg %p237
        %p359 = pneg %p234
        %s360 = sand.u32 %s224, 1
        %s361 = scalar_lea.sflag [#allocation3], %s360
        %s362 = sand.u32 %s224, 1
        %s363 = smul.addr %s362, 8
        %s364 = scalar_lea.vmem [#allocation5], %s363
        %p365 = scmp.lt.s32.totalorder %s23, 1
        %s366 = scalar_select %p365, %s23, 1
        %s367 = scalar_lea.vmem %s0, %s366
        %p368 = scmp.lt.s32.totalorder %s23, 1
        %s369 = scalar_select %p368, %s23, 1
        %s370 = scalar_lea.vmem %s1, %s369
        %p371 = scmp.lt.s32.totalorder %s23, 1
        %s372 = scalar_select %p371, %s23, 1
        %s373 = smul.addr %s372, 4
        %s374 = smul.addr %s373, 8
        %s375 = scalar_lea.vmem %s2, %s374
        %p376 = scmp.lt.s32.totalorder %s23, 1
        %s377 = scalar_select %p376, %s23, 1
        %s378 = smul.addr %s377, 2
        %s379 = smul.addr %s378, 4
        %s380 = scalar_lea.vmem %s3, %s379
        %p381 = scmp.lt.s32.totalorder %s23, 1
        %s382 = scalar_select %p381, %s23, 1
        %s383 = smul.addr %s382, 2
        %s384 = smul.addr %s383, 4
        %s385 = scalar_lea.vmem %s4, %s384
        %v386 = vld [vmem:[%s380] sm:$0xff]
        %v387 = vld [vmem:[%s385] sm:$0xff]
        %v388 = vld [vmem:[%s367] sm:$0x1]
        %v390 = vlaneseq
        %v391 = vshrl.u32 %v390, 7
        %v392 = vsub.s32 0, %v391
        %v393 = vrot.slane %v388, %v392
        %394 = vset.pattern.permute.xlu0 0
        %395 = vperm.xlu0 %394, %v393
        %v396 = vpop.permute.xlu0 %395
        %v398 = vmul.f32 %v396, %v386
        %v399 = vld [vmem:[%s370] sm:$0x1]
        %v401 = vlaneseq
        %v402 = vshrl.u32 %v401, 7
        %v403 = vsub.s32 0, %v402
        %v404 = vrot.slane %v399, %v403
        %405 = vset.pattern.permute.xlu0 0
        %406 = vperm.xlu0 %405, %v404
        %v407 = vpop.permute.xlu0 %406
        %v409 = vmul.f32 %v407, %v387
        %v410 = vadd.f32 %v398, %v409
        %v411 = vld [vmem:[%s5] sm:$0xff]
        %v412 = vld [vmem:[%s5 + $0x8] sm:$0xff]
        %v413 = vld [vmem:[%s5 + $0x10] sm:$0xff]
        %v414 = vld [vmem:[%s5 + $0x18] sm:$0xff]
        %v415 = vld [vmem:[%s6] sm:$0xf]
        %v416 = vld [vmem:[%s375] sm:$0xff]
        %v417 = vld [vmem:[%s375 + $0x8] sm:$0xff]
        %v418 = vld [vmem:[%s375 + $0x10] sm:$0xff]
        %v419 = vld [vmem:[%s375 + $0x18] sm:$0xff]
        %421 = vset.pattern.permute.xlu0 0
        %422 = vperm.xlu0 %421, %v416
        %v423 = vpop.permute.xlu0 %422
        %426 = vset.pattern.permute.xlu0 0
        %427 = vperm.xlu0 %426, %v417
        %v428 = vpop.permute.xlu0 %427
        %431 = vset.pattern.permute.xlu0 0
        %432 = vperm.xlu0 %431, %v418
        %v433 = vpop.permute.xlu0 %432
        %436 = vset.pattern.permute.xlu0 0
        %437 = vperm.xlu0 %436, %v419
        %v438 = vpop.permute.xlu0 %437
        %v441 = vcombine.high %v410, %v410
        %vm442 = vcmask 31744
        %v444 = vsel %vm442, %v411, 0
        %v447 = vsel %vm442, %v412, 0
        %v450 = vsel %vm442, %v413, 0
        %v453 = vsel %vm442, %v414, 0
        %vm455 = vcmask 1043456
        %v456 = vsel %vm455, %v410, 0
        %v458 = vsel %vm455, %v441, 0
        %460 = vmatprep.subr.mxu0 0.0
        %461 = vmatpush1.msra.mxu0 0.0
        %462 = vmatprep.subr.mxu0 0.0
        %463 = vmatpush1.msra.mxu0 0.0
        %464 = vmatprep.subr.mxu0 0.0
        %465 = vmatpush1.msra.mxu0 0.0
        %466 = vmatprep.subr.mxu0 0.0
        %467 = vmatpush1.msra.mxu0 0.0
        %468 = vmatprep.subr.mxu0 0.0
        %469 = vmatpush1.msra.mxu0 0.0
        %470 = vmatprep.subr.mxu0 0.0
        %471 = vmatpush1.msra.mxu0 0.0
        %472 = vmatprep.subr.mxu0 0.0
        %473 = vmatpush1.msra.mxu0 0.0
        %474 = vmatprep.subr.mxu0 0.0
        %475 = vmatpush1.msra.mxu0 0.0
        %476 = vmatprep.subr.mxu0 0.0
        %477 = vmatpush1.msra.mxu0 0.0
        %478 = vmatprep.subr.mxu0 0.0
        %479 = vmatpush1.msra.mxu0 0.0
        %480 = vmatprep.subr.mxu0 0.0
        %481 = vmatpush1.msra.mxu0 0.0
        %482 = vmatprep.subr.mxu0 0.0
        %483 = vmatpush1.msra.mxu0 0.0
        %484 = vmatprep.subr.mxu0 0.0
        %485 = vmatpush1.msra.mxu0 0.0
        %486 = vmatprep.subr.mxu0 0.0
        %487 = vmatpush1.msra.mxu0 0.0
        %488 = vmatprep.subr.mxu0 0.0
        %489 = vmatpush1.msra.mxu0 0.0
        %490 = vmatprep.subr.mxu0 %v458
        %491 = vmatpush1.msra.mxu0 %v456
        %492 = vmatprep.subr.mxu0 0.0
        %493 = vmatpush2.msra.mxu0 0.0
        %494 = vmatprep.subr.mxu0 0.0
        %495 = vmatpush2.msra.mxu0 0.0
        %496 = vmatprep.subr.mxu0 0.0
        %497 = vmatpush2.msra.mxu0 0.0
        %498 = vmatprep.subr.mxu0 0.0
        %499 = vmatpush2.msra.mxu0 0.0
        %500 = vmatprep.subr.mxu0 0.0
        %501 = vmatpush2.msra.mxu0 0.0
        %502 = vmatprep.subr.mxu0 0.0
        %503 = vmatpush2.msra.mxu0 0.0
        %504 = vmatprep.subr.mxu0 0.0
        %505 = vmatpush2.msra.mxu0 0.0
        %506 = vmatprep.subr.mxu0 0.0
        %507 = vmatpush2.msra.mxu0 0.0
        %508 = vmatprep.subr.mxu0 0.0
        %509 = vmatpush2.msra.mxu0 0.0
        %510 = vmatprep.subr.mxu0 0.0
        %511 = vmatpush2.msra.mxu0 0.0
        %512 = vmatprep.subr.mxu0 0.0
        %513 = vmatpush2.msra.mxu0 0.0
        %514 = vmatprep.subr.mxu0 0.0
        %515 = vmatpush2.msra.mxu0 0.0
        %516 = vmatprep.subr.mxu0 0.0
        %517 = vmatpush2.msra.mxu0 0.0
        %518 = vmatprep.subr.mxu0 0.0
        %519 = vmatpush2.msra.mxu0 0.0
        %520 = vmatprep.subr.mxu0 0.0
        %521 = vmatpush2.msra.mxu0 0.0
        %522 = vmatprep.subr.mxu0 0.0
        %523 = vmatpush2.msra.mxu0 0.0
        %524 = vmatprep.mubr.f32.mxu0 0.0
        %525 = vmatmul.mubr.f32.gmra.mxu0 %v444
        %v526 = vpop.f32.mrf.mxu0
        %v527 = vadd.f32 %v423, %v526
        %v528 = vpop.f32.mrf.mxu0
        %v529 = vadd.f32 %v423, %v528
        %530 = vmatprep.mubr.f32.mxu0 0.0
        %531 = vmatmul.mubr.f32.gmra.mxu0 %v447
        %v532 = vpop.f32.mrf.mxu0
        %v533 = vadd.f32 %v428, %v532
        %v534 = vpop.f32.mrf.mxu0
        %v535 = vadd.f32 %v428, %v534
        %536 = vmatprep.mubr.f32.mxu0 0.0
        %537 = vmatmul.mubr.f32.gmra.mxu0 %v450
        %v538 = vpop.f32.mrf.mxu0
        %v539 = vadd.f32 %v433, %v538
        %v540 = vpop.f32.mrf.mxu0
        %v541 = vadd.f32 %v433, %v540
        %542 = vmatprep.mubr.f32.mxu0 0.0
        %543 = vmatmul.mubr.f32.gmra.mxu0 %v453
        %v544 = vpop.f32.mrf.mxu0
        %v545 = vadd.f32 %v438, %v544
        %v546 = vpop.f32.mrf.mxu0
        %v547 = vadd.f32 %v438, %v546
        %548 = vdwg.mxu0
        %v549 = vmax.f32 %v527, 0.0
        %v550 = vmax.f32 %v529, 0.0
        %v551 = vmax.f32 %v533, 0.0
        %v552 = vmax.f32 %v535, 0.0
        %v553 = vmax.f32 %v539, 0.0
        %v554 = vmax.f32 %v541, 0.0
        %v555 = vmax.f32 %v545, 0.0
        %v556 = vmax.f32 %v547, 0.0
        %v557 = vlaneseq
        %v558 = vshrl.u32 %v557, 7
        %vm559 = vcmp.eq.s32.totalorder %v558, 0
        %s560 = sld [smem:[#allocation2]]
        %v561 = vstv %s560
        %v562 = vsel %vm559, %v561, 0.0
        %vm563 = vcmp.eq.s32.totalorder %v558, 1
        %s564 = sld [smem:[#allocation2 + $0x1]]
        %v565 = vstv %s564
        %v566 = vsel %vm563, %v565, %v562
        %vm567 = vcmp.eq.s32.totalorder %v558, 2
        %s568 = sld [smem:[#allocation2 + $0x2]]
        %v569 = vstv %s568
        %v570 = vsel %vm567, %v569, %v566
        %vm571 = vcmp.eq.s32.totalorder %v558, 3
        %s572 = sld [smem:[#allocation2 + $0x3]]
        %v573 = vstv %s572
        %v574 = vsel %vm571, %v573, %v570
        %vm575 = vcmask 261120
        %v577 = vsel %vm575, %v415, 0
        %579 = vmatprep.subr.mxu0 0.0
        %580 = vmatpush1.msra.mxu0 0.0
        %581 = vmatprep.subr.mxu0 0.0
        %582 = vmatpush1.msra.mxu0 0.0
        %583 = vmatprep.subr.mxu0 0.0
        %584 = vmatpush1.msra.mxu0 0.0
        %585 = vmatprep.subr.mxu0 0.0
        %586 = vmatpush1.msra.mxu0 0.0
        %587 = vmatprep.subr.mxu0 0.0
        %588 = vmatpush1.msra.mxu0 0.0
        %589 = vmatprep.subr.mxu0 0.0
        %590 = vmatpush1.msra.mxu0 0.0
        %591 = vmatprep.subr.mxu0 0.0
        %592 = vmatpush1.msra.mxu0 0.0
        %593 = vmatprep.subr.mxu0 0.0
        %594 = vmatpush1.msra.mxu0 0.0
        %595 = vmatprep.subr.mxu0 0.0
        %596 = vmatpush1.msra.mxu0 0.0
        %597 = vmatprep.subr.mxu0 0.0
        %598 = vmatpush1.msra.mxu0 0.0
        %599 = vmatprep.subr.mxu0 0.0
        %600 = vmatpush1.msra.mxu0 0.0
        %601 = vmatprep.subr.mxu0 0.0
        %602 = vmatpush1.msra.mxu0 0.0
        %603 = vmatprep.subr.mxu0 %v556
        %604 = vmatpush1.msra.mxu0 %v555
        %605 = vmatprep.subr.mxu0 %v554
        %606 = vmatpush1.msra.mxu0 %v553
        %607 = vmatprep.subr.mxu0 %v552
        %608 = vmatpush1.msra.mxu0 %v551
        %609 = vmatprep.subr.mxu0 %v550
        %610 = vmatpush1.msra.mxu0 %v549
        %611 = vmatprep.subr.mxu0 0.0
        %612 = vmatpush2.msra.mxu0 0.0
        %613 = vmatprep.subr.mxu0 0.0
        %614 = vmatpush2.msra.mxu0 0.0
        %615 = vmatprep.subr.mxu0 0.0
        %616 = vmatpush2.msra.mxu0 0.0
        %617 = vmatprep.subr.mxu0 0.0
        %618 = vmatpush2.msra.mxu0 0.0
        %619 = vmatprep.subr.mxu0 0.0
        %620 = vmatpush2.msra.mxu0 0.0
        %621 = vmatprep.subr.mxu0 0.0
        %622 = vmatpush2.msra.mxu0 0.0
        %623 = vmatprep.subr.mxu0 0.0
        %624 = vmatpush2.msra.mxu0 0.0
        %625 = vmatprep.subr.mxu0 0.0
        %626 = vmatpush2.msra.mxu0 0.0
        %627 = vmatprep.subr.mxu0 0.0
        %628 = vmatpush2.msra.mxu0 0.0
        %629 = vmatprep.subr.mxu0 0.0
        %630 = vmatpush2.msra.mxu0 0.0
        %631 = vmatprep.subr.mxu0 0.0
        %632 = vmatpush2.msra.mxu0 0.0
        %633 = vmatprep.subr.mxu0 0.0
        %634 = vmatpush2.msra.mxu0 0.0
        %635 = vmatprep.subr.mxu0 0.0
        %636 = vmatpush2.msra.mxu0 0.0
        %637 = vmatprep.subr.mxu0 0.0
        %638 = vmatpush2.msra.mxu0 0.0
        %639 = vmatprep.subr.mxu0 0.0
        %640 = vmatpush2.msra.mxu0 0.0
        %641 = vmatprep.subr.mxu0 0.0
        %642 = vmatpush2.msra.mxu0 0.0
        %643 = vmatprep.mubr.f32.mxu0 0.0
        %644 = vmatmul.mubr.f32.gmra.mxu0 %v577
        %v645 = vpop.f32.mrf.mxu0
        %v646 = vadd.f32 %v574, %v645
        %v647 = vpop.f32.mrf.mxu0
        %v648 = vadd.f32 %v574, %v647
        %649 = vdwg.mxu0
        %v651 = vcombine.high %v387, %v387
        %v653 = vsub.f32 %v646, %v387
        %v654 = vsub.f32 %v648, %v651
        %v655 = vmul.f32 %v653, %v653
        %v656 = vmul.f32 %v654, %v654
        %v659 = vcombine.low %v655, %v656
        %661 = vst [vmem:[%s364] sm:$0xff] %v659
        %s662 = sand.u32 %s224, 1
        %s663 = scalar_lea.sflag [#allocation3], %s662
        %s664 = sand.u32 %s224, 1
        %s665 = smul.addr %s664, 8
        %s666 = scalar_lea.vmem [#allocation5], %s665
        // Predicated region
        $region57: #{tpu_custom_call.1} parent=51 // pred_check
          %p667 = pneg %p234
        $region58: #{tpu_custom_call.1} parent=51 // pred_check_branch
          %669 = sbr.rel (%p667) target = $region60
        $region59: #{tpu_custom_call.1} parent=51 // pred_region
          %s671 = ssub.s32 128, 128
          %672 = vsyncadd %s663, %s671
          %s673 = smul.addr %s23, 2
          %s674 = smul.addr %s673, 64
          %s675 = scalar_lea.hbm %s8, %s674
          %s677 = sshll.u32 %s666, 4
          %s678 = int_to_ptr.vmem [resolvable:$true] %s677
          %680 = dma.vmem_to_hbm [thread:$0]  %s678, 128, %s675, %s663
        $region60: #{tpu_custom_call.1} parent=51 // pred_fallthru
          _
      $region52: #{tpu_custom_call.1} parent=5 // pred_fallthru
        _
      %p681 = scmp.le.s32.totalorder 2, %s18
      // Predicated region
      $region61: #{tpu_custom_call.1} parent=5 // pred_check
        %p682 = pneg %p681
      $region62: #{tpu_custom_call.1} parent=5 // pred_check_branch
        %684 = sbr.rel (%p682) target = $region64
      $region63: #{tpu_custom_call.1} parent=5 // pred_region
        %s685 = ssub.s32 %s18, 2
        // Predicated region
        $region65: #{tpu_custom_call.1} parent=63 // pred_check
          %p686 = pneg %p240
        $region66: #{tpu_custom_call.1} parent=63 // pred_check_branch
          %688 = sbr.rel (%p686) target = $region68
        $region67: #{tpu_custom_call.1} parent=63 // pred_region
          %s689 = sand.u32 %s225, 1
          %s690 = scalar_lea.sflag [#allocation3], %s689
          %s691 = sand.u32 %s225, 1
          %s692 = smul.addr %s691, 8
          %s693 = scalar_lea.vmem [#allocation5], %s692
          %694 = dma.done %s690, 128
        $region68: #{tpu_custom_call.1} parent=63 // pred_fallthru
          _
      $region64: #{tpu_custom_call.1} parent=5 // pred_fallthru
        _
    $region6: #{tpu_custom_call.1} parent=1 // loop_footer
      %s22 = sadd.s32 1, %s18
    $region7: #{tpu_custom_call.1} parent=1 // loop_footer_branch
      %17 = sbr.rel target = $region3
    $region8: #{tpu_custom_call.1} parent=1 // loop_exit
      _
    %695 = vsyncpa [#allocation3], 1
    %s696 = scalar_lea.sflag [#allocation3], 1
    %697 = vsyncpa %s696, 1
    %698 = vsyncpa [#allocation4], 1
    %s699 = scalar_lea.sflag [#allocation4], 1
    %700 = vsyncpa %s699, 1

</llo_original>
